<compile_context>
chip_gen: v6e
topology: v6e:2x2x1
jax: 0.10.0
libtpu: 0.0.40
codegen_flags: <defaults>
</compile_context>

<pallas_src>
import jax
import jax.numpy as jnp
from jax.experimental import pallas as pl
from jax.experimental.pallas import tpu as pltpu


# --------------------------------------------------------------------------- kernels
def _pe_kernel_flat(x_ref, w_ref, b_ref, o_ref):
    # x_ref: (tm, C*P)   w_ref: (C*P, E)   b_ref: (1, E)   o_ref: (tm, E)
    o = jnp.dot(x_ref[...], w_ref[...], preferred_element_type=jnp.float32)
    o_ref[...] = (o + b_ref[...]).astype(o_ref.dtype)


def _pe_kernel_multichan(x_ref, w_ref, b_ref, o_ref, acc_ref):
    # Per-channel reduction: grid = (B, n_patch_blocks, C), channel axis last.
    # x_ref: (tp, P)   w_ref: (P, E) (channel slice)   o_ref: (tp, E)   acc: (tp, E) f32
    c = pl.program_id(2)

    @pl.when(c == 0)
    def _():
        acc_ref[...] = jnp.zeros_like(acc_ref)

    acc_ref[...] += jnp.dot(x_ref[...], w_ref[...],
                            preferred_element_type=jnp.float32)

    @pl.when(c == pl.num_programs(2) - 1)
    def _():
        o_ref[...] = (acc_ref[...] + b_ref[...]).astype(o_ref.dtype)


# --------------------------------------------------------------------------- helpers
def _cdiv(a, b):
    return (a + b - 1) // b


def _round_up(x, m):
    return _cdiv(x, m) * m


def _choose_row_tile(rows, tm):
    """Row tile: <= rows (rounded to 8), >= 2 grid steps when there is enough work
    (v7x has 2 TensorCores), 256-aligned when large."""
    t = max(8, min(tm, _round_up(rows, 8)))
    if rows > 8 and _cdiv(rows, t) < 2:
        t = _round_up(_cdiv(rows, 2), 8)
    align = 256 if t >= 256 else 8
    t = max(8, (t // align) * align)
    return t


def fuse_patch_embed_params(conv_w, conv_b, lin_w, lin_b):
    """Hoisted out of the forward pass: fuse Conv1d + Linear weights once at init."""
    hidden, in_chans, patch_size = conv_w.shape
    embed_dim = lin_w.shape[0]
    w_fused = conv_w.reshape(hidden, in_chans * patch_size).T @ lin_w.T   # (C*P, E)
    b_fused = (conv_b @ lin_w.T + lin_b).reshape(1, embed_dim)            # (1, E)
    return w_fused, b_fused


# --------------------------------------------------------------------------- wrapper
def patch_embedding(x, w_fused, b_fused, *, patch_size=8, tm=2048, out_dtype=None):
    """x: (B, in_chans, L) -> (B, L // patch_size, embed_dim)."""
    B, C, L = x.shape
    assert L % patch_size == 0, "L must be a multiple of patch_size"
    n_patch = L // patch_size
    embed_dim = w_fused.shape[1]
    out_dtype = x.dtype if out_dtype is None else out_dtype

    if C == 1:
        # Pure reshape: rows are the non-overlapping patches; single-pass GEMM+bias.
        M = B * n_patch
        patches = x.reshape(M, patch_size)
        tm_eff = _choose_row_tile(M, tm)
        out = pl.pallas_call(
            _pe_kernel_flat,
            out_shape=jax.ShapeDtypeStruct((M, embed_dim), out_dtype),
            grid=(_cdiv(M, tm_eff),),
            in_specs=[
                pl.BlockSpec((tm_eff, patch_size), lambda i: (i, 0)),
                pl.BlockSpec((patch_size, embed_dim), lambda i: (0, 0)),
                pl.BlockSpec((1, embed_dim), lambda i: (0, 0)),
            ],
            out_specs=pl.BlockSpec((tm_eff, embed_dim), lambda i: (i, 0)),
            compiler_params=pltpu.CompilerParams(
                dimension_semantics=("parallel",)),
        )(patches, w_fused, b_fused)
        return out.reshape(B, n_patch, embed_dim)

    # C > 1: no host-side transpose.  Free reshape to (B, C, n_patch, P) and reduce
    # over channels on the trailing ("arbitrary") grid axis with a VMEM accumulator.
    x4 = x.reshape(B, C, n_patch, patch_size)
    tp = _choose_row_tile(n_patch, tm)
    return pl.pallas_call(
        _pe_kernel_multichan,
        out_shape=jax.ShapeDtypeStruct((B, n_patch, embed_dim), out_dtype),
        grid=(B, _cdiv(n_patch, tp), C),
        in_specs=[
            pl.BlockSpec((None, None, tp, patch_size),
                         lambda b, j, c: (b, c, j, 0)),
            pl.BlockSpec((patch_size, embed_dim), lambda b, j, c: (c, 0)),
            pl.BlockSpec((1, embed_dim), lambda b, j, c: (0, 0)),
        ],
        out_specs=pl.BlockSpec((None, tp, embed_dim), lambda b, j, c: (b, j, 0)),
        scratch_shapes=[pltpu.VMEM((tp, embed_dim), jnp.float32)],
        compiler_params=pltpu.CompilerParams(
            dimension_semantics=("parallel", "parallel", "arbitrary")),
    )(x4, w_fused, b_fused)


# --------------------------------------------------------------------------- reference
def _reference(x, conv_w, conv_b, lin_w, lin_b, patch_size=8):
    B, C, L = x.shape
    n_patch = L // patch_size
    hidden = conv_w.shape[0]
    patches = (
        x.reshape(B, C, n_patch, patch_size)
         .transpose(0, 2, 1, 3)
         .reshape(B, n_patch, C * patch_size)
    )
    h = patches @ conv_w.reshape(hidden, C * patch_size).T + conv_b
    return h @ lin_w.T + lin_b


def _make_params(key, in_chans, hidden, embed_dim, patch_size):
    kcw, kcb, klw, klb = jax.random.split(key, 4)
    fan_conv = in_chans * patch_size
    conv_w = jax.random.uniform(kcw, (hidden, in_chans, patch_size), jnp.float32,
                                -1.0 / fan_conv ** 0.5, 1.0 / fan_conv ** 0.5)
    conv_b = jax.random.uniform(kcb, (hidden,), jnp.float32,
                                -1.0 / fan_conv ** 0.5, 1.0 / fan_conv ** 0.5)
    lin_w = jax.random.uniform(klw, (embed_dim, hidden), jnp.float32,
                               -1.0 / hidden ** 0.5, 1.0 / hidden ** 0.5)
    lin_b = jax.random.uniform(klb, (embed_dim,), jnp.float32,
                               -1.0 / hidden ** 0.5, 1.0 / hidden ** 0.5)
    return conv_w, conv_b, lin_w, lin_b


if __name__ == "__main__":
    patch_size = 8
    hidden = 64
    embed_dim = 256
    B, L = 2, 64  # -> 8 patches per batch element

    key = jax.random.PRNGKey(0)
    k1, k2, k3, k4 = jax.random.split(key, 4)

    # --- module default: in_chans = 1 (flat single-GEMM path) ---------------
    in_chans = 1
    x = jax.random.normal(k1, (B, in_chans, L), dtype=jnp.float32)
    conv_w, conv_b, lin_w, lin_b = _make_params(k2, in_chans, hidden, embed_dim, patch_size)
    w_fused, b_fused = fuse_patch_embed_params(conv_w, conv_b, lin_w, lin_b)

    out = patch_embedding(x, w_fused, b_fused, patch_size=patch_size)
    out = jax.block_until_ready(out)
    ref = _reference(x, conv_w, conv_b, lin_w, lin_b, patch_size=patch_size)
    assert out.shape == (B, L // patch_size, embed_dim), out.shape
    assert jnp.allclose(out, ref, atol=1e-4, rtol=1e-4), "mismatch (in_chans=1)"

    # --- multi-channel path: in_chans = 3 (per-channel reduction kernel) ----
    in_chans = 3
    x3 = jax.random.normal(k3, (B, in_chans, L), dtype=jnp.float32)
    conv_w3, conv_b3, lin_w3, lin_b3 = _make_params(k4, in_chans, hidden, embed_dim, patch_size)
    w_fused3, b_fused3 = fuse_patch_embed_params(conv_w3, conv_b3, lin_w3, lin_b3)

    out3 = patch_embedding(x3, w_fused3, b_fused3, patch_size=patch_size)
    out3 = jax.block_until_ready(out3)
    ref3 = _reference(x3, conv_w3, conv_b3, lin_w3, lin_b3, patch_size=patch_size)
    assert out3.shape == (B, L // patch_size, embed_dim), out3.shape
    assert jnp.allclose(out3, ref3, atol=1e-4, rtol=1e-4), "mismatch (in_chans=3)"

    print("KERNEL_OK")
</pallas_src>

<mosaic_0001>
module attributes {stable_mosaic.version = 11 : i64} {
  func.func @_pe_kernel_flat(%arg0: i32, %arg1: memref<8x8xf32, #tpu.memory_space<vmem>>, %arg2: memref<8x256xf32, #tpu.memory_space<vmem>>, %arg3: memref<1x256xf32, #tpu.memory_space<vmem>>, %arg4: memref<8x256xf32, #tpu.memory_space<vmem>>) attributes {dimension_semantics = [#tpu.dimension_semantics<parallel>], iteration_bounds = array<i64: 2>, scalar_prefetch = 0 : i64, scratch_operands = 0 : i64, tpu.core_type = #tpu.core_type<tc>, window_params = [{transform_indices = @transform_0, window_bounds = array<i64: 8, 8>}, {pipeline_mode = #tpu.pipeline_mode<synchronous>, transform_indices = @transform_1, window_bounds = array<i64: 8, 256>}, {pipeline_mode = #tpu.pipeline_mode<synchronous>, transform_indices = @transform_2, window_bounds = array<i64: 1, 256>}, {transform_indices = @transform_3, window_bounds = array<i64: 8, 256>}]} {
    %c0 = arith.constant 0 : index
    %c0_0 = arith.constant 0 : index
    %0 = vector.load %arg1[%c0, %c0_0] : memref<8x8xf32, #tpu.memory_space<vmem>>, vector<8x8xf32>
    %c0_1 = arith.constant 0 : index
    %c0_2 = arith.constant 0 : index
    %1 = vector.load %arg2[%c0_1, %c0_2] : memref<8x256xf32, #tpu.memory_space<vmem>>, vector<8x256xf32>
    %cst = arith.constant dense<0.000000e+00> : vector<8x256xf32>
    %2 = tpu.matmul %0, %1, %cst {dimension_numbers = #tpu.dot_dimension_numbers<[1], [0], [0], [1], [0, 0, 1, 1], [], []>} : vector<8x8xf32>, vector<8x256xf32>, vector<8x256xf32> -> vector<8x256xf32>
    %c0_3 = arith.constant 0 : index
    %c0_4 = arith.constant 0 : index
    %3 = vector.load %arg3[%c0_3, %c0_4] : memref<1x256xf32, #tpu.memory_space<vmem>>, vector<1x256xf32>
    %4 = vector.broadcast %3 : vector<1x256xf32> to vector<8x256xf32>
    %5 = arith.addf %2, %4 : vector<8x256xf32>
    %c0_5 = arith.constant 0 : index
    %c0_6 = arith.constant 0 : index
    %6 = vector.load %arg4[%c0_5, %c0_6] : memref<8x256xf32, #tpu.memory_space<vmem>>, vector<8x256xf32>
    tpu.vector_store %arg4[%c0_5, %c0_6], %5 {strides = array<i32>} : memref<8x256xf32, #tpu.memory_space<vmem>>, vector<8x256xf32>,
    return
  }
  func.func @transform_0(%arg0: i32) -> (i32, i32) {
    %c0_i32 = arith.constant 0 : i32
    %c0_i32_0 = arith.constant 0 : i32
    return %arg0, %c0_i32 : i32, i32
  }
  func.func @transform_1(%arg0: i32) -> (i32, i32) {
    %c0_i32 = arith.constant 0 : i32
    %c0_i32_0 = arith.constant 0 : i32
    %c0_i32_1 = arith.constant 0 : i32
    return %c0_i32, %c0_i32_0 : i32, i32
  }
  func.func @transform_2(%arg0: i32) -> (i32, i32) {
    %c0_i32 = arith.constant 0 : i32
    %c0_i32_0 = arith.constant 0 : i32
    %c0_i32_1 = arith.constant 0 : i32
    return %c0_i32, %c0_i32_0 : i32, i32
  }
  func.func @transform_3(%arg0: i32) -> (i32, i32) {
    %c0_i32 = arith.constant 0 : i32
    %c0_i32_0 = arith.constant 0 : i32
    return %arg0, %c0_i32 : i32, i32
  }
}

</mosaic_0001>

<llo_original>
// kernel: tpu_custom_call.1
$region0: #{tpu_custom_call.1}
  #allocation0 [shape = 'u32[]', space=smem, size = 0x4, offset = 0x4, fixed_abs, tag = 'smem constant byte address 0x4 - core index']
  #allocation1 [shape = 'u32[144,128]{1,0:T(1,128)}', space=vmem, size = 0x12000, scoped, tag = 'internal scratch']
  %s0 = inlined_call_operand.vmem [shape: f32[16,8], index: 0, kind: input, shape index: {}]
  %s1 = inlined_call_operand.vmem [shape: f32[8,256], index: 1, kind: input, shape index: {}]
  %s2 = inlined_call_operand.vmem [shape: f32[1,256], index: 2, kind: input, shape index: {}]
  %s3 = inlined_call_operand.hbm [shape: f32[16,256], index: 3, kind: output, shape index: {}]
  %s4 = sld [smem:[#allocation0]]
  $region45: #{tpu_custom_call.1} parent=0
    _
  %s6 = ssub.s32 1, %s4
  %s7 = scalar_select 0, %s6, %s4
  $region1: #{tpu_custom_call.1} parent=0
    #allocation2 [shape = 'u8[16384]{0}', space=vmem, size = 0x4000, scoped, tag = 'output window, operand 0']
    #allocation3 [shape = 's32[2]{0}', space=sflag, size = 0x8, scoped, tag = 'scoped memory for tpu_custom_call.1']
    %8 = vsyncpa [#allocation3], 0
    %s9 = scalar_lea.sflag [#allocation3], 1
    %10 = vsyncpa %s9, 0
    loop: start=0, step=1, limit=4
    $region2: #{tpu_custom_call.1} parent=1 // loop_pre_header
      _
    $region3: #{tpu_custom_call.1} parent=1 // loop_header
      %s12 = sphi 0, %s16
      %p13 = scmp.ge.s32.totalorder %s12, 4
      %s22 = sphi 0, %s24
      %s25 = sphi 0, %s22
      %s26 = sphi 0, %s25
      %s42 = sphi 0, %s26
      %s46 = sphi 0, %s46
      %s48 = sphi 0, %s46
      %s49 = sphi 0, %s48
      %s63 = sphi 0, %s49
      %s67 = sphi 0, %s67
      %s69 = sphi 0, %s67
      %s70 = sphi 0, %s69
      %s84 = sphi 0, %s70
      %s90 = sphi 0, %s92
      %s93 = sphi 0, %s90
      %s94 = sphi 0, %s93
      %s110 = sphi 0, %s94
    $region4: #{tpu_custom_call.1} parent=1 // loop_header_branch
      %15 = sbr.rel (%p13) target = $region8
    $region5: #{tpu_custom_call.1} parent=1 // loop_body
      %s17 = ssub.s32 %s12, 1
      %s18 = ssub.s32 %s12, 2
      %s19 = sadd.s32 %s12, 1
      %s20 = ssub.s32 %s12, %s19
      %p21 = scmp.eq.s32.totalorder %s20, 0
      %s23 = sadd.s32 %s22, 1
      %s24 = scalar_select %p21, %s22, %s23
      %p27 = pneg %p21
      %p28 = scmp.eq.s32.totalorder %s12, 1
      %p29 = por %p27, %p28
      %p30 = scmp.ne.s32.totalorder %s22, %s25
      %p31 = scmp.eq.s32.totalorder %s12, 0
      %p32 = por %p30, %p31
      %p33 = scmp.ne.s32.totalorder %s22, %s25
      %p34 = scmp.eq.s32.totalorder %s17, 1
      %p35 = por %p33, %p34
      %p36 = scmp.ne.s32.totalorder %s25, %s26
      %p37 = scmp.eq.s32.totalorder %s17, 0
      %p38 = por %p36, %p37
      %p39 = scmp.ne.s32.totalorder %s25, %s26
      %p40 = scmp.eq.s32.totalorder %s18, 1
      %p41 = por %p39, %p40
      %p43 = scmp.ne.s32.totalorder %s26, %s42
      %p44 = scmp.eq.s32.totalorder %s18, 0
      %p45 = por %p43, %p44
      %s47 = sadd.s32 %s46, 1
      %p50 = scmp.eq.s32.totalorder %s12, 1
      %p51 = scmp.ne.s32.totalorder %s46, %s48
      %p52 = scmp.eq.s32.totalorder %s12, 0
      %p53 = por %p51, %p52
      %p54 = scmp.ne.s32.totalorder %s46, %s48
      %p55 = scmp.eq.s32.totalorder %s17, 1
      %p56 = por %p54, %p55
      %p57 = scmp.ne.s32.totalorder %s48, %s49
      %p58 = scmp.eq.s32.totalorder %s17, 0
      %p59 = por %p57, %p58
      %p60 = scmp.ne.s32.totalorder %s48, %s49
      %p61 = scmp.eq.s32.totalorder %s18, 1
      %p62 = por %p60, %p61
      %p64 = scmp.ne.s32.totalorder %s49, %s63
      %p65 = scmp.eq.s32.totalorder %s18, 0
      %p66 = por %p64, %p65
      %s68 = sadd.s32 %s67, 1
      %p71 = scmp.eq.s32.totalorder %s12, 1
      %p72 = scmp.ne.s32.totalorder %s67, %s69
      %p73 = scmp.eq.s32.totalorder %s12, 0
      %p74 = por %p72, %p73
      %p75 = scmp.ne.s32.totalorder %s67, %s69
      %p76 = scmp.eq.s32.totalorder %s17, 1
      %p77 = por %p75, %p76
      %p78 = scmp.ne.s32.totalorder %s69, %s70
      %p79 = scmp.eq.s32.totalorder %s17, 0
      %p80 = por %p78, %p79
      %p81 = scmp.ne.s32.totalorder %s69, %s70
      %p82 = scmp.eq.s32.totalorder %s18, 1
      %p83 = por %p81, %p82
      %p85 = scmp.ne.s32.totalorder %s70, %s84
      %p86 = scmp.eq.s32.totalorder %s18, 0
      %p87 = por %p85, %p86
      %s88 = ssub.s32 %s12, %s19
      %p89 = scmp.eq.s32.totalorder %s88, 0
      %s91 = sadd.s32 %s90, 1
      %s92 = scalar_select %p89, %s90, %s91
      %p95 = pneg %p89
      %p96 = scmp.eq.s32.totalorder %s12, 1
      %p97 = por %p95, %p96
      %p98 = scmp.ne.s32.totalorder %s90, %s93
      %p99 = scmp.eq.s32.totalorder %s12, 0
      %p100 = por %p98, %p99
      %p101 = scmp.ne.s32.totalorder %s90, %s93
      %p102 = scmp.eq.s32.totalorder %s17, 1
      %p103 = por %p101, %p102
      %p104 = scmp.ne.s32.totalorder %s93, %s94
      %p105 = scmp.eq.s32.totalorder %s17, 0
      %p106 = por %p104, %p105
      %p107 = scmp.ne.s32.totalorder %s93, %s94
      %p108 = scmp.eq.s32.totalorder %s18, 1
      %p109 = por %p107, %p108
      %p111 = scmp.ne.s32.totalorder %s94, %s110
      %p112 = scmp.eq.s32.totalorder %s18, 0
      %p113 = por %p111, %p112
      %p114 = scmp.le.s32.totalorder 1, %s12
      %p115 = scmp.lt.s32.totalorder %s12, 3
      %p116 = pnand %p114, %p115
      %p117 = pneg %p116
      // Predicated region
      $region9: #{tpu_custom_call.1} parent=5 // pred_check
        _
      $region10: #{tpu_custom_call.1} parent=5 // pred_check_branch
        %119 = sbr.rel (%p116) target = $region12
      $region11: #{tpu_custom_call.1} parent=5 // pred_region
        %s120 = ssub.s32 %s12, 1
        // Predicated region
        $region13: #{tpu_custom_call.1} parent=11 // pred_check
          %p121 = pneg %p59
        $region14: #{tpu_custom_call.1} parent=11 // pred_check_branch
          %123 = sbr.rel (%p121) target = $region16
        $region15: #{tpu_custom_call.1} parent=11 // pred_region
          _
        $region16: #{tpu_custom_call.1} parent=11 // pred_fallthru
          _
        // Predicated region
        $region17: #{tpu_custom_call.1} parent=11 // pred_check
          %p124 = pneg %p80
        $region18: #{tpu_custom_call.1} parent=11 // pred_check_branch
          %126 = sbr.rel (%p124) target = $region20
        $region19: #{tpu_custom_call.1} parent=11 // pred_region
          _
        $region20: #{tpu_custom_call.1} parent=11 // pred_fallthru
          _
      $region12: #{tpu_custom_call.1} parent=5 // pred_fallthru
        _
      %p127 = scmp.lt.s32.totalorder %s12, 2
      // Predicated region
      $region21: #{tpu_custom_call.1} parent=5 // pred_check
        %p128 = pneg %p127
      $region22: #{tpu_custom_call.1} parent=5 // pred_check_branch
        %130 = sbr.rel (%p128) target = $region24
      $region23: #{tpu_custom_call.1} parent=5 // pred_region
        // Predicated region
        $region25: #{tpu_custom_call.1} parent=23 // pred_check
          %p131 = pneg %p32
        $region26: #{tpu_custom_call.1} parent=23 // pred_check_branch
          %133 = sbr.rel (%p131) target = $region28
        $region27: #{tpu_custom_call.1} parent=23 // pred_region
          %p134 = scmp.lt.s32.totalorder %s12, 1
          %s135 = scalar_select %p134, %s12, 1
          %s136 = smul.addr %s135, 8
          %s137 = scalar_lea.vmem %s0, %s136
        $region28: #{tpu_custom_call.1} parent=23 // pred_fallthru
          _
      $region24: #{tpu_custom_call.1} parent=5 // pred_fallthru
        _
      %p138 = scmp.le.s32.totalorder 1, %s12
      %p139 = scmp.lt.s32.totalorder %s12, 3
      %p140 = pnand %p138, %p139
      %p141 = pneg %p140
      // Predicated region
      $region29: #{tpu_custom_call.1} parent=5 // pred_check
        _
      $region30: #{tpu_custom_call.1} parent=5 // pred_check_branch
        %143 = sbr.rel (%p140) target = $region32
      $region31: #{tpu_custom_call.1} parent=5 // pred_region
        %s144 = ssub.s32 %s12, 1
        %p145 = scmp.lt.s32.totalorder %s17, 1
        %s146 = scalar_select %p145, %s17, 1
        %s147 = smul.addr %s146, 8
        %s148 = scalar_lea.vmem %s0, %s147
        %p149 = pneg %p38
        %p150 = pneg %p35
        %p151 = pneg %p59
        %p152 = pneg %p56
        %p153 = pneg %p80
        %p154 = pneg %p77
        %p155 = pneg %p106
        %p156 = pneg %p103
        %s157 = sand.u32 %s93, 1
        %s158 = scalar_lea.sflag [#allocation3], %s157
        %s159 = sand.u32 %s93, 1
        %s160 = smul.addr %s159, 16
        %s161 = scalar_lea.vmem [#allocation2], %s160
        %p162 = scmp.lt.s32.totalorder %s17, 1
        %s163 = scalar_select %p162, %s17, 1
        %s164 = smul.addr %s163, 8
        %s165 = scalar_lea.vmem %s0, %s164
        %v166 = vld [vmem:[%s165] sm:$0xff]
        %v167 = vld [vmem:[%s1] sm:$0xff]
        %v168 = vld [vmem:[%s1 + $0x8] sm:$0xff]
        %v169 = vld [vmem:[%s2] sm:$0x3]
        %v171 = vlaneseq
        %v172 = vshrl.u32 %v171, 7
        %v173 = vsub.s32 0, %v172
        %v174 = vrot.slane %v169, %v173
        %v175 = vlaneseq
        %v176 = vshrl.u32 %v175, 7
        %v177 = vsub.s32 1, %v176
        %v178 = vrot.slane %v169, %v177
        %vm181 = vcmask 64512
        %v183 = vsel %vm181, %v166, 0
        %185 = vmatprep.subr.mxu0 0.0
        %186 = vmatpush1.msra.mxu0 0.0
        %187 = vmatprep.subr.mxu0 0.0
        %188 = vmatpush1.msra.mxu0 0.0
        %189 = vmatprep.subr.mxu0 0.0
        %190 = vmatpush1.msra.mxu0 0.0
        %191 = vmatprep.subr.mxu0 0.0
        %192 = vmatpush1.msra.mxu0 0.0
        %193 = vmatprep.subr.mxu0 0.0
        %194 = vmatpush1.msra.mxu0 0.0
        %195 = vmatprep.subr.mxu0 0.0
        %196 = vmatpush1.msra.mxu0 0.0
        %197 = vmatprep.subr.mxu0 0.0
        %198 = vmatpush1.msra.mxu0 0.0
        %199 = vmatprep.subr.mxu0 0.0
        %200 = vmatpush1.msra.mxu0 0.0
        %201 = vmatprep.subr.mxu0 0.0
        %202 = vmatpush1.msra.mxu0 0.0
        %203 = vmatprep.subr.mxu0 0.0
        %204 = vmatpush1.msra.mxu0 0.0
        %205 = vmatprep.subr.mxu0 0.0
        %206 = vmatpush1.msra.mxu0 0.0
        %207 = vmatprep.subr.mxu0 0.0
        %208 = vmatpush1.msra.mxu0 0.0
        %209 = vmatprep.subr.mxu0 0.0
        %210 = vmatpush1.msra.mxu0 0.0
        %211 = vmatprep.subr.mxu0 0.0
        %212 = vmatpush1.msra.mxu0 0.0
        %213 = vmatprep.subr.mxu0 0.0
        %214 = vmatpush1.msra.mxu0 0.0
        %215 = vmatprep.subr.mxu0 %v168
        %216 = vmatpush1.msra.mxu0 %v167
        %217 = vmatprep.subr.mxu0 0.0
        %218 = vmatpush2.msra.mxu0 0.0
        %219 = vmatprep.subr.mxu0 0.0
        %220 = vmatpush2.msra.mxu0 0.0
        %221 = vmatprep.subr.mxu0 0.0
        %222 = vmatpush2.msra.mxu0 0.0
        %223 = vmatprep.subr.mxu0 0.0
        %224 = vmatpush2.msra.mxu0 0.0
        %225 = vmatprep.subr.mxu0 0.0
        %226 = vmatpush2.msra.mxu0 0.0
        %227 = vmatprep.subr.mxu0 0.0
        %228 = vmatpush2.msra.mxu0 0.0
        %229 = vmatprep.subr.mxu0 0.0
        %230 = vmatpush2.msra.mxu0 0.0
        %231 = vmatprep.subr.mxu0 0.0
        %232 = vmatpush2.msra.mxu0 0.0
        %233 = vmatprep.subr.mxu0 0.0
        %234 = vmatpush2.msra.mxu0 0.0
        %235 = vmatprep.subr.mxu0 0.0
        %236 = vmatpush2.msra.mxu0 0.0
        %237 = vmatprep.subr.mxu0 0.0
        %238 = vmatpush2.msra.mxu0 0.0
        %239 = vmatprep.subr.mxu0 0.0
        %240 = vmatpush2.msra.mxu0 0.0
        %241 = vmatprep.subr.mxu0 0.0
        %242 = vmatpush2.msra.mxu0 0.0
        %243 = vmatprep.subr.mxu0 0.0
        %244 = vmatpush2.msra.mxu0 0.0
        %245 = vmatprep.subr.mxu0 0.0
        %246 = vmatpush2.msra.mxu0 0.0
        %247 = vmatprep.subr.mxu0 0.0
        %248 = vmatpush2.msra.mxu0 0.0
        %249 = vmatprep.mubr.f32.mxu0 0.0
        %250 = vmatmul.mubr.f32.gmra.mxu0 %v183
        %v251 = vpop.f32.mrf.mxu0
        %v252 = vadd.f32 %v174, %v251
        %v253 = vpop.f32.mrf.mxu0
        %v254 = vadd.f32 %v178, %v253
        %255 = vdwg.mxu0
        %256 = vst [vmem:[%s161] sm:$0xff] %v252
        %257 = vst [vmem:[%s161 + $0x8] sm:$0xff] %v254
        %s258 = sand.u32 %s93, 1
        %s259 = scalar_lea.sflag [#allocation3], %s258
        %s260 = sand.u32 %s93, 1
        %s261 = smul.addr %s260, 16
        %s262 = scalar_lea.vmem [#allocation2], %s261
        // Predicated region
        $region33: #{tpu_custom_call.1} parent=31 // pred_check
          %p263 = pneg %p103
        $region34: #{tpu_custom_call.1} parent=31 // pred_check_branch
          %265 = sbr.rel (%p263) target = $region36
        $region35: #{tpu_custom_call.1} parent=31 // pred_region
          %s267 = ssub.s32 256, 256
          %268 = vsyncadd %s259, %s267
          %s269 = smul.addr %s17, 2
          %s270 = smul.addr %s269, 128
          %s271 = scalar_lea.hbm %s3, %s270
          %s273 = sshll.u32 %s262, 4
          %s274 = int_to_ptr.vmem [resolvable:$true] %s273
          %276 = dma.vmem_to_hbm [thread:$0]  %s274, 256, %s271, %s259
        $region36: #{tpu_custom_call.1} parent=31 // pred_fallthru
          _
      $region32: #{tpu_custom_call.1} parent=5 // pred_fallthru
        _
      %p277 = scmp.le.s32.totalorder 2, %s12
      // Predicated region
      $region37: #{tpu_custom_call.1} parent=5 // pred_check
        %p278 = pneg %p277
      $region38: #{tpu_custom_call.1} parent=5 // pred_check_branch
        %280 = sbr.rel (%p278) target = $region40
      $region39: #{tpu_custom_call.1} parent=5 // pred_region
        %s281 = ssub.s32 %s12, 2
        // Predicated region
        $region41: #{tpu_custom_call.1} parent=39 // pred_check
          %p282 = pneg %p109
        $region42: #{tpu_custom_call.1} parent=39 // pred_check_branch
          %284 = sbr.rel (%p282) target = $region44
        $region43: #{tpu_custom_call.1} parent=39 // pred_region
          %s285 = sand.u32 %s94, 1
          %s286 = scalar_lea.sflag [#allocation3], %s285
          %s287 = sand.u32 %s94, 1
          %s288 = smul.addr %s287, 16
          %s289 = scalar_lea.vmem [#allocation2], %s288
          %290 = dma.done %s286, 256
        $region44: #{tpu_custom_call.1} parent=39 // pred_fallthru
          _
      $region40: #{tpu_custom_call.1} parent=5 // pred_fallthru
        _
    $region6: #{tpu_custom_call.1} parent=1 // loop_footer
      %s16 = sadd.s32 1, %s12
    $region7: #{tpu_custom_call.1} parent=1 // loop_footer_branch
      %11 = sbr.rel target = $region3
    $region8: #{tpu_custom_call.1} parent=1 // loop_exit
      _
    %291 = vsyncpa [#allocation3], 1
    %s292 = scalar_lea.sflag [#allocation3], 1
    %293 = vsyncpa %s292, 1

</llo_original>
